<compile_context>
chip_gen: v7x
topology: tpu7x:2x2x1
jax: 0.10.0
libtpu: 0.0.40
codegen_flags: <defaults>
</compile_context>

<pallas_src>
import jax
import jax.numpy as jnp
from jax.experimental import pallas as pl
from jax.experimental.pallas import tpu as pltpu

_LANE = 128
_WIDTHS = (4096, 2048, 1024, 512, 256, _LANE)


def _fusion_kernel(x_ref, y_ref, o_ref):
    x = x_ref[...]
    y = y_ref[...]
    d = x - y
    # relu(x + y) - (x - y)^2  ==  -(x - y)^2 + relu(x + y)
    o_ref[...] = jnp.maximum(x + y, 0) - d * d


@jax.jit
def _fusion_xla(x, y):
    # Fallback for tiny / ragged inputs: XLA fuses this into a single
    # memory-bound loop (same 3*n bytes of HBM traffic as the kernel),
    # avoiding pallas_call launch overhead and any pad/concat extra passes.
    d = x - y
    return jnp.maximum(x + y, 0) - d * d


def _sublane_multiple(dtype):
    itemsize = jnp.dtype(dtype).itemsize
    return max(8, 32 // itemsize)  # f32 -> 8, bf16 -> 16, int8/fp8 -> 32


def fusion(x, y, *,
           target_block_bytes=4 << 20,   # ~4 MiB per buffer
           min_pallas_bytes=1 << 20,     # below this, XLA fallback wins
           force_pallas=False):
    """Elementwise fusion: -(x - y)**2 + relu(x + y)."""
    assert x.shape == y.shape and x.dtype == y.dtype
    orig_shape = x.shape
    n = x.size
    itemsize = jnp.dtype(x.dtype).itemsize

    if n == 0:
        return jnp.zeros(orig_shape, x.dtype)

    # Tiny tensors: fixed pallas_call launch + pipeline prologue dominates.
    if not force_pallas and n * itemsize < min_pallas_bytes:
        return _fusion_xla(x, y)

    # Widest lane-dense slab width that divides n exactly (zero-copy reshape).
    width = next((w for w in _WIDTHS if n % w == 0), None)
    if width is None:
        # Ragged (n not a multiple of 128): the fused XLA loop is already at
        # HBM roofline; any pad/slice/concat dance only adds traffic.
        return _fusion_xla(x, y)

    rows = n // width
    x2 = x.reshape(rows, width)
    y2 = y.reshape(rows, width)

    # --- Tile sizing ---------------------------------------------------------
    # Aim for ~target_block_bytes per buffer, but guarantee an even grid of at
    # least 2 steps whenever the tensor can be split on a sublane boundary
    # (megacore sharding on v7x + DMA/compute/writeback overlap everywhere).
    sub = _sublane_multiple(x.dtype)
    total_bytes = rows * width * itemsize
    num_steps = max(2, pl.cdiv(total_bytes, target_block_bytes))
    num_steps += num_steps % 2                       # even step count
    tile_rows = pl.cdiv(rows, num_steps)
    tile_rows = pl.cdiv(tile_rows, sub) * sub        # round up to sublanes
    tile_rows = max(sub, min(tile_rows, rows))
    if rows < 2 * sub:
        tile_rows = rows                             # too small to split

    grid = (pl.cdiv(rows, tile_rows),)               # trailing block is masked
    spec = pl.BlockSpec((tile_rows, width), lambda i: (i, 0))

    out2 = pl.pallas_call(
        _fusion_kernel,
        out_shape=jax.ShapeDtypeStruct((rows, width), x.dtype),
        grid_spec=pltpu.PrefetchScalarGridSpec(
            num_scalar_prefetch=0,
            grid=grid,
            in_specs=[spec, spec],
            out_specs=spec,
        ),
        compiler_params=pltpu.CompilerParams(
            dimension_semantics=("parallel",),
            vmem_limit_bytes=48 * 1024 * 1024,
        ),
        cost_estimate=pl.CostEstimate(
            flops=6 * n,                 # sub, mul, add, max, sub (per elem)
            transcendentals=0,
            bytes_accessed=3 * n * itemsize,
        ),
    )(x2, y2)

    return out2.reshape(orig_shape)


def fusion_ref(x, y):
    return -(x - y) ** 2 + jnp.maximum(x + y, 0)


if __name__ == "__main__":
    key = jax.random.PRNGKey(0)

    # 1) Module-shaped small input, forced through the Pallas kernel path.
    kx, ky, key = jax.random.split(key, 3)
    x = jax.random.normal(kx, (2, 4, 16, 16), dtype=jnp.float32)
    y = jax.random.normal(ky, (2, 4, 16, 16), dtype=jnp.float32)
    out = fusion(x, y, force_pallas=True)
    jax.block_until_ready(out)
    assert out.shape == x.shape and out.dtype == x.dtype
    assert jnp.allclose(out, fusion_ref(x, y), atol=1e-6, rtol=1e-6)

    # 2) Larger input exercising a multi-step parallel grid (~4 MiB blocks).
    kx, ky, key = jax.random.split(key, 3)
    x2 = jax.random.normal(kx, (8, 16, 128, 256), dtype=jnp.float32)  # 16 MiB
    y2 = jax.random.normal(ky, (8, 16, 128, 256), dtype=jnp.float32)
    out2 = fusion(x2, y2)
    jax.block_until_ready(out2)
    assert jnp.allclose(out2, fusion_ref(x2, y2), atol=1e-5, rtol=1e-5)

    # 3) Small default path (XLA fallback) -- same semantics.
    out3 = fusion(x, y)
    jax.block_until_ready(out3)
    assert jnp.allclose(out3, fusion_ref(x, y), atol=1e-6, rtol=1e-6)

    # 4) Ragged size (element count not a multiple of 128) -- XLA fallback.
    kx, ky, key = jax.random.split(key, 3)
    x4 = jax.random.normal(kx, (3, 3, 5, 5), dtype=jnp.float32)
    y4 = jax.random.normal(ky, (3, 3, 5, 5), dtype=jnp.float32)
    out4 = fusion(x4, y4)
    jax.block_until_ready(out4)
    assert jnp.allclose(out4, fusion_ref(x4, y4), atol=1e-6, rtol=1e-6)

    print("KERNEL_OK")
</pallas_src>

<mosaic_0001>
module attributes {stable_mosaic.version = 11 : i64} {
  func.func @_fusion_kernel(%arg0: i32, %arg1: memref<1x2048xf32, #tpu.memory_space<vmem>>, %arg2: memref<1x2048xf32, #tpu.memory_space<vmem>>, %arg3: memref<1x2048xf32, #tpu.memory_space<vmem>>) attributes {dimension_semantics = [#tpu.dimension_semantics<parallel>], iteration_bounds = array<i64: 1>, scalar_prefetch = 0 : i64, scratch_operands = 0 : i64, tpu.core_type = #tpu.core_type<tc>, window_params = [{transform_indices = @transform_0, window_bounds = array<i64: 1, 2048>}, {transform_indices = @transform_1, window_bounds = array<i64: 1, 2048>}, {transform_indices = @transform_2, window_bounds = array<i64: 1, 2048>}]} {
    %c0 = arith.constant 0 : index
    %c0_0 = arith.constant 0 : index
    %0 = vector.load %arg1[%c0, %c0_0] : memref<1x2048xf32, #tpu.memory_space<vmem>>, vector<1x2048xf32>
    %c0_1 = arith.constant 0 : index
    %c0_2 = arith.constant 0 : index
    %1 = vector.load %arg2[%c0_1, %c0_2] : memref<1x2048xf32, #tpu.memory_space<vmem>>, vector<1x2048xf32>
    %2 = arith.subf %0, %1 : vector<1x2048xf32>
    %3 = arith.addf %0, %1 : vector<1x2048xf32>
    %cst = arith.constant 0.000000e+00 : f32
    %4 = vector.broadcast %cst : f32 to vector<1x2048xf32>
    %5 = arith.maximumf %3, %4 : vector<1x2048xf32>
    %6 = arith.mulf %2, %2 : vector<1x2048xf32>
    %7 = arith.subf %5, %6 : vector<1x2048xf32>
    %c0_3 = arith.constant 0 : index
    %c0_4 = arith.constant 0 : index
    %8 = vector.load %arg3[%c0_3, %c0_4] : memref<1x2048xf32, #tpu.memory_space<vmem>>, vector<1x2048xf32>
    tpu.vector_store %arg3[%c0_3, %c0_4], %7 {strides = array<i32>} : memref<1x2048xf32, #tpu.memory_space<vmem>>, vector<1x2048xf32>,
    return
  }
  func.func @transform_0(%arg0: i32) -> (i32, i32) {
    %c0_i32 = arith.constant 0 : i32
    %c0_i32_0 = arith.constant 0 : i32
    return %arg0, %c0_i32 : i32, i32
  }
  func.func @transform_1(%arg0: i32) -> (i32, i32) {
    %c0_i32 = arith.constant 0 : i32
    %c0_i32_0 = arith.constant 0 : i32
    return %arg0, %c0_i32 : i32, i32
  }
  func.func @transform_2(%arg0: i32) -> (i32, i32) {
    %c0_i32 = arith.constant 0 : i32
    %c0_i32_0 = arith.constant 0 : i32
    return %arg0, %c0_i32 : i32, i32
  }
}

</mosaic_0001>

<llo_original>
// kernel: tpu_custom_call.1
$region0: #{tpu_custom_call.1}
  #allocation0 [shape = 'u32[]', space=smem, size = 0x4, offset = 0x4, fixed_abs, tag = 'smem constant byte address 0x4 - core index']
  #allocation1 [shape = 'u32[144,128]{1,0:T(1,128)}', space=vmem, size = 0x12000, scoped, tag = 'internal scratch']
  %s0 = inlined_call_operand.hbm [shape: f32[1,2048], index: 0, kind: input, shape index: {}]
  %s1 = inlined_call_operand.hbm [shape: f32[1,2048], index: 1, kind: input, shape index: {}]
  %s2 = inlined_call_operand.hbm [shape: f32[1,2048], index: 2, kind: output, shape index: {}]
  %s3 = sld [smem:[#allocation0]]
  $region26: #{tpu_custom_call.1} parent=0
    _
  %s5 = ssub.s32 1, %s3
  %s6 = scalar_select 0, %s5, %s3
  $region1: #{tpu_custom_call.1} parent=0
    #allocation2 [shape = 'u8[8192]{0}', space=vmem, size = 0x2000, scoped, tag = 'input window, operand 0, single buffered']
    #allocation3 [shape = 's32[1]{0}', space=sflag, size = 0x4, scoped, tag = 'scoped memory for tpu_custom_call.1']
    #allocation4 [shape = 's32[1]{0}', space=sflag, size = 0x4, scoped, tag = 'scoped memory for tpu_custom_call.1']
    #allocation5 [shape = 'u8[8192]{0}', space=vmem, size = 0x2000, scoped, tag = 'input window, operand 1, single buffered']
    #allocation6 [shape = 's32[1]{0}', space=sflag, size = 0x4, scoped, tag = 'scoped memory for tpu_custom_call.1']
    #allocation7 [shape = 'u8[8192]{0}', space=vmem, size = 0x2000, scoped, tag = 'output window, operand 0, single buffered']
    %7 = vsyncpa [#allocation3], 0
    %8 = vsyncpa [#allocation6], 0
    %9 = vsyncpa [#allocation4], 0
    // Predicated region
    $region2: #{tpu_custom_call.1} parent=1 // pred_check
      _
    $region3: #{tpu_custom_call.1} parent=1 // pred_check_branch
      %11 = sbr.rel (0) target = $region5
    $region4: #{tpu_custom_call.1} parent=1 // pred_region
      %s13 = ssub.s32 256, 256
      %14 = vsyncadd [#allocation3], %s13
      %s16 = sshll.u32 [#allocation2], 4
      %s17 = int_to_ptr.vmem [resolvable:$true] %s16
      %19 = dma.hbm_to_vmem [thread:$0]  %s0, 256, %s17, [#allocation3]
    $region5: #{tpu_custom_call.1} parent=1 // pred_fallthru
      _
    // Predicated region
    $region6: #{tpu_custom_call.1} parent=1 // pred_check
      _
    $region7: #{tpu_custom_call.1} parent=1 // pred_check_branch
      %21 = sbr.rel (0) target = $region9
    $region8: #{tpu_custom_call.1} parent=1 // pred_region
      %s23 = ssub.s32 256, 256
      %24 = vsyncadd [#allocation6], %s23
      %s26 = sshll.u32 [#allocation5], 4
      %s27 = int_to_ptr.vmem [resolvable:$true] %s26
      %29 = dma.hbm_to_vmem [thread:$0]  %s1, 256, %s27, [#allocation6]
    $region9: #{tpu_custom_call.1} parent=1 // pred_fallthru
      _
    // Predicated region
    $region10: #{tpu_custom_call.1} parent=1 // pred_check
      _
    $region11: #{tpu_custom_call.1} parent=1 // pred_check_branch
      %31 = sbr.rel (0) target = $region13
    $region12: #{tpu_custom_call.1} parent=1 // pred_region
      %32 = dma.done [#allocation3], 256
    $region13: #{tpu_custom_call.1} parent=1 // pred_fallthru
      _
    // Predicated region
    $region14: #{tpu_custom_call.1} parent=1 // pred_check
      _
    $region15: #{tpu_custom_call.1} parent=1 // pred_check_branch
      %34 = sbr.rel (0) target = $region17
    $region16: #{tpu_custom_call.1} parent=1 // pred_region
      %35 = dma.done [#allocation6], 256
    $region17: #{tpu_custom_call.1} parent=1 // pred_fallthru
      _
    %v36 = vld [vmem:[#allocation2] sm:$0xff]
    %v37 = vld [vmem:[#allocation2 + $0x8] sm:$0xff]
    %v38 = vld [vmem:[#allocation5] sm:$0xff]
    %v39 = vld [vmem:[#allocation5 + $0x8] sm:$0xff]
    %v40 = vsub.f32 %v36, %v38
    %v41 = vsub.f32 %v37, %v39
    %v42 = vadd.f32 %v36, %v38
    %v43 = vadd.f32 %v37, %v39
    %v44 = vmax.f32 %v42, 0.0
    %v45 = vmax.f32 %v43, 0.0
    %v46 = vmul.f32 %v40, %v40
    %v47 = vmul.f32 %v41, %v41
    %v48 = vsub.f32 %v44, %v46
    %v49 = vsub.f32 %v45, %v47
    %50 = vst [vmem:[#allocation7] sm:$0xff] %v48
    %51 = vst [vmem:[#allocation7 + $0x8] sm:$0xff] %v49
    // Predicated region
    $region18: #{tpu_custom_call.1} parent=1 // pred_check
      _
    $region19: #{tpu_custom_call.1} parent=1 // pred_check_branch
      %53 = sbr.rel (0) target = $region21
    $region20: #{tpu_custom_call.1} parent=1 // pred_region
      %s55 = ssub.s32 256, 256
      %56 = vsyncadd [#allocation4], %s55
      %s58 = sshll.u32 [#allocation7], 4
      %s59 = int_to_ptr.vmem [resolvable:$true] %s58
      %61 = dma.vmem_to_hbm [thread:$0]  %s59, 256, %s2, [#allocation4]
    $region21: #{tpu_custom_call.1} parent=1 // pred_fallthru
      _
    // Predicated region
    $region22: #{tpu_custom_call.1} parent=1 // pred_check
      _
    $region23: #{tpu_custom_call.1} parent=1 // pred_check_branch
      %63 = sbr.rel (0) target = $region25
    $region24: #{tpu_custom_call.1} parent=1 // pred_region
      %64 = dma.done [#allocation4], 256
    $region25: #{tpu_custom_call.1} parent=1 // pred_fallthru
      _
    %65 = vsyncpa [#allocation3], 1
    %66 = vsyncpa [#allocation6], 1
    %67 = vsyncpa [#allocation4], 1

</llo_original>
